<compile_context>
chip_gen: v7x
topology: tpu7x:2x2x1
jax: 0.10.0
libtpu: 0.0.40
codegen_flags: <defaults>
</compile_context>

<pallas_src>
import functools

import jax
import jax.numpy as jnp
from jax.experimental import pallas as pl
from jax.experimental.pallas import tpu as pltpu


def _round_up(x, m):
    return (x + m - 1) // m * m


def _patch_embed_kernel(x_ref, w_ref, b_ref, o_ref):
    # x_ref: (TM, K) patch rows; w_ref: (K, Ep); b_ref: (1, Ep); o_ref: (TM, Ep)
    acc = jnp.dot(x_ref[...], w_ref[...], preferred_element_type=jnp.float32)
    o_ref[...] = (acc + b_ref[...]).astype(o_ref.dtype)


def patch_embed(x, weight, bias, patch_size, *, compute_dtype=None, tm_target=1024):
    """Swin-V2 PatchEmbed forward (norm_layer=None).

    x:      (B, C, H, W)   NCHW, like the PyTorch module
    weight: (E, C, p, p)   PyTorch Conv2d weight (OIHW)
    bias:   (E,)
    returns (B, Hp*Wp, E)  ==  proj(x).flatten(2).transpose(1, 2)
    """
    B, C, H, W = x.shape
    E = weight.shape[0]
    p = patch_size
    assert H % p == 0 and W % p == 0, "image size must be divisible by patch size"
    Hp, Wp = H // p, W // p
    num_patches = Hp * Wp

    K = C * p * p
    M = B * num_patches

    # ---- patchify (glue; candidate for XLA input fusion into the kernel) ----
    # (B, C, Hp, p, Wp, p) -> (B, Hp, Wp, C, p, p) -> (M, K)
    # The (C, kh, kw) flattening order matches the OIHW weight reshape below.
    xp = x.reshape(B, C, Hp, p, Wp, p)
    xp = jnp.transpose(xp, (0, 2, 4, 1, 3, 5)).reshape(M, K)

    # Conv weight (E, C, p, p) -> (K, E); bias -> (1, E) kept in f32.
    w = weight.reshape(E, K).T
    b = bias.reshape(1, E).astype(jnp.float32)

    if compute_dtype is not None:  # optional bandwidth saver (bf16 on v5e/v6e)
        xp = xp.astype(compute_dtype)
        w = w.astype(compute_dtype)

    # ---- pad for TPU-friendly tiling ----------------------------------------
    # Lane-dense output: pad embed dim to a multiple of 128 -> unmasked stores.
    Ep = _round_up(E, 128)
    if Ep != E:
        w = jnp.pad(w, ((0, 0), (0, Ep - E)))
        b = jnp.pad(b, ((0, 0), (0, Ep - E)))

    # Large, sublane-aligned M tiles; pad M up to a tile multiple instead of
    # ever falling back to one whole-array block (keeps VMEM use bounded at
    # ~2 * TM * (K + Ep) * 4 bytes regardless of batch size / resolution).
    if M >= tm_target:
        TM = tm_target
    else:
        TM = _round_up(M, 8)
    Mp = _round_up(M, TM)
    if Mp != M:
        xp = jnp.pad(xp, ((0, Mp - M), (0, 0)))

    grid = (Mp // TM,)

    out = pl.pallas_call(
        _patch_embed_kernel,
        out_shape=jax.ShapeDtypeStruct((Mp, Ep), x.dtype),
        grid_spec=pltpu.PrefetchScalarGridSpec(
            num_scalar_prefetch=0,
            grid=grid,
            in_specs=[
                pl.BlockSpec((TM, K), lambda i: (i, 0)),   # LHS row tile
                pl.BlockSpec((K, Ep), lambda i: (0, 0)),   # weight, resident
                pl.BlockSpec((1, Ep), lambda i: (0, 0)),   # bias, resident
            ],
            out_specs=pl.BlockSpec((TM, Ep), lambda i: (i, 0)),
        ),
        compiler_params=pltpu.CompilerParams(
            dimension_semantics=("parallel",),
            # Let XLA fuse the patchify transpose/reshape producer of xp into
            # the kernel's input reads (avoids the (M,K) HBM round trip).
            allow_input_fusion=[True, False, False],
        ),
    )(xp, w, b)

    out = out[:M, :E]
    return out.reshape(B, num_patches, E)


def _reference(x, weight, bias, patch_size):
    # Pure-JAX reference (== nn.Conv2d(stride=patch) + flatten(2).transpose(1,2))
    B = x.shape[0]
    E = weight.shape[0]
    ref = jax.lax.conv_general_dilated(
        x, weight, window_strides=(patch_size, patch_size), padding="VALID",
        dimension_numbers=("NCHW", "OIHW", "NCHW"))
    ref = ref + bias[None, :, None, None]
    return ref.reshape(B, E, -1).transpose(0, 2, 1)


if __name__ == "__main__":
    pe = jax.jit(patch_embed,
                 static_argnames=("patch_size", "compute_dtype", "tm_target"))

    # --- primary test: small shapes consistent with the module ---------------
    # img_size=16, patch_size=4, in_chans=4, embed_dim=32, batch=2
    B, C, H, W = 2, 4, 16, 16
    patch_size = 4
    embed_dim = 32

    key = jax.random.PRNGKey(0)
    kx, kw, kb = jax.random.split(key, 3)
    x = jax.random.normal(kx, (B, C, H, W), dtype=jnp.float32)
    weight = jax.random.normal(
        kw, (embed_dim, C, patch_size, patch_size), dtype=jnp.float32) * 0.02
    bias = jax.random.normal(kb, (embed_dim,), dtype=jnp.float32) * 0.02

    out = pe(x, weight, bias, patch_size=patch_size)
    out = jax.block_until_ready(out)
    ref = _reference(x, weight, bias, patch_size)
    assert out.shape == (B, (H // patch_size) * (W // patch_size), embed_dim)
    assert jnp.allclose(out, ref, atol=1e-4, rtol=1e-4)

    # --- secondary sanity: exercises M-padding, E-padding and grid > 1 -------
    B2, C2, H2, W2, E2 = 2, 3, 96, 96, 96      # M = 1152 -> TM=1024, Mp=2048
    k2x, k2w, k2b = jax.random.split(jax.random.PRNGKey(0), 3)
    x2 = jax.random.normal(k2x, (B2, C2, H2, W2), dtype=jnp.float32)
    w2 = jax.random.normal(
        k2w, (E2, C2, patch_size, patch_size), dtype=jnp.float32) * 0.02
    b2 = jax.random.normal(k2b, (E2,), dtype=jnp.float32) * 0.02

    out2 = jax.block_until_ready(pe(x2, w2, b2, patch_size=patch_size))
    ref2 = _reference(x2, w2, b2, patch_size)
    assert out2.shape == (B2, (H2 // patch_size) * (W2 // patch_size), E2)
    assert jnp.allclose(out2, ref2, atol=1e-4, rtol=1e-4)

    print("KERNEL_OK")
</pallas_src>

<mosaic_0001>
module attributes {stable_mosaic.version = 11 : i64} {
  func.func @_patch_embed_kernel(%arg0: i32, %arg1: memref<32x64xf32, #tpu.memory_space<vmem>>, %arg2: memref<64x128xf32, #tpu.memory_space<vmem>>, %arg3: memref<1x128xf32, #tpu.memory_space<vmem>>, %arg4: memref<32x128xf32, #tpu.memory_space<vmem>>) attributes {dimension_semantics = [#tpu.dimension_semantics<parallel>], iteration_bounds = array<i64: 1>, scalar_prefetch = 0 : i64, scratch_operands = 0 : i64, tpu.core_type = #tpu.core_type<tc>, window_params = [{transform_indices = @transform_0, window_bounds = array<i64: 32, 64>}, {pipeline_mode = #tpu.pipeline_mode<synchronous>, transform_indices = @transform_1, window_bounds = array<i64: 64, 128>}, {pipeline_mode = #tpu.pipeline_mode<synchronous>, transform_indices = @transform_2, window_bounds = array<i64: 1, 128>}, {transform_indices = @transform_3, window_bounds = array<i64: 32, 128>}]} {
    %c0 = arith.constant 0 : index
    %c0_0 = arith.constant 0 : index
    %0 = vector.load %arg1[%c0, %c0_0] : memref<32x64xf32, #tpu.memory_space<vmem>>, vector<32x64xf32>
    %c0_1 = arith.constant 0 : index
    %c0_2 = arith.constant 0 : index
    %1 = vector.load %arg2[%c0_1, %c0_2] : memref<64x128xf32, #tpu.memory_space<vmem>>, vector<64x128xf32>
    %cst = arith.constant dense<0.000000e+00> : vector<32x128xf32>
    %2 = tpu.matmul %0, %1, %cst {dimension_numbers = #tpu.dot_dimension_numbers<[1], [0], [0], [1], [0, 0, 1, 1], [], []>} : vector<32x64xf32>, vector<64x128xf32>, vector<32x128xf32> -> vector<32x128xf32>
    %c0_3 = arith.constant 0 : index
    %c0_4 = arith.constant 0 : index
    %3 = vector.load %arg3[%c0_3, %c0_4] : memref<1x128xf32, #tpu.memory_space<vmem>>, vector<1x128xf32>
    %4 = vector.broadcast %3 : vector<1x128xf32> to vector<32x128xf32>
    %5 = arith.addf %2, %4 : vector<32x128xf32>
    %c0_5 = arith.constant 0 : index
    %c0_6 = arith.constant 0 : index
    %6 = vector.load %arg4[%c0_5, %c0_6] : memref<32x128xf32, #tpu.memory_space<vmem>>, vector<32x128xf32>
    tpu.vector_store %arg4[%c0_5, %c0_6], %5 {strides = array<i32>} : memref<32x128xf32, #tpu.memory_space<vmem>>, vector<32x128xf32>,
    return
  }
  func.func @transform_0(%arg0: i32) -> (i32, i32) {
    %c0_i32 = arith.constant 0 : i32
    %c0_i32_0 = arith.constant 0 : i32
    return %arg0, %c0_i32 : i32, i32
  }
  func.func @transform_1(%arg0: i32) -> (i32, i32) {
    %c0_i32 = arith.constant 0 : i32
    %c0_i32_0 = arith.constant 0 : i32
    %c0_i32_1 = arith.constant 0 : i32
    return %c0_i32, %c0_i32_0 : i32, i32
  }
  func.func @transform_2(%arg0: i32) -> (i32, i32) {
    %c0_i32 = arith.constant 0 : i32
    %c0_i32_0 = arith.constant 0 : i32
    %c0_i32_1 = arith.constant 0 : i32
    return %c0_i32, %c0_i32_0 : i32, i32
  }
  func.func @transform_3(%arg0: i32) -> (i32, i32) {
    %c0_i32 = arith.constant 0 : i32
    %c0_i32_0 = arith.constant 0 : i32
    return %arg0, %c0_i32 : i32, i32
  }
}

</mosaic_0001>

<llo_original>
// kernel: patch_embed.1
$region0: #{patch_embed.1}
  #allocation0 [shape = 'u32[]', space=smem, size = 0x4, offset = 0x4, fixed_abs, tag = 'smem constant byte address 0x4 - core index']
  #allocation1 [shape = 'u32[144,128]{1,0:T(1,128)}', space=vmem, size = 0x12000, scoped, tag = 'internal scratch']
  %s0 = inlined_call_operand.vmem [shape: f32[32,64], index: 0, kind: input, shape index: {}]
  %s1 = inlined_call_operand.vmem [shape: f32[64,128], index: 1, kind: input, shape index: {}]
  %s2 = inlined_call_operand.vmem [shape: f32[1,128], index: 2, kind: input, shape index: {}]
  %s3 = inlined_call_operand.hbm [shape: f32[32,128], index: 3, kind: output, shape index: {}]
  %s4 = sld [smem:[#allocation0]]
  $region22: #{patch_embed.1} parent=0
    _
  %s6 = ssub.s32 1, %s4
  %s7 = scalar_select 0, %s6, %s4
  $region1: #{patch_embed.1} parent=0
    #allocation2 [shape = 'u8[16384]{0}', space=vmem, size = 0x4000, scoped, tag = 'output window, operand 0, single buffered']
    #allocation3 [shape = 's32[1]{0}', space=sflag, size = 0x4, scoped, tag = 'scoped memory for patch_embed.1']
    %8 = vsyncpa [#allocation3], 0
    // Predicated region
    $region2: #{patch_embed.1} parent=1 // pred_check
      _
    $region3: #{patch_embed.1} parent=1 // pred_check_branch
      %10 = sbr.rel (0) target = $region5
    $region4: #{patch_embed.1} parent=1 // pred_region
      _
    $region5: #{patch_embed.1} parent=1 // pred_fallthru
      _
    // Predicated region
    $region6: #{patch_embed.1} parent=1 // pred_check
      _
    $region7: #{patch_embed.1} parent=1 // pred_check_branch
      %12 = sbr.rel (0) target = $region9
    $region8: #{patch_embed.1} parent=1 // pred_region
      _
    $region9: #{patch_embed.1} parent=1 // pred_fallthru
      _
    // Predicated region
    $region10: #{patch_embed.1} parent=1 // pred_check
      _
    $region11: #{patch_embed.1} parent=1 // pred_check_branch
      %14 = sbr.rel (0) target = $region13
    $region12: #{patch_embed.1} parent=1 // pred_region
      _
    $region13: #{patch_embed.1} parent=1 // pred_fallthru
      _
    %v15 = vld [vmem:[%s0] sm:$0xff]
    %v16 = vld [vmem:[%s0 + $0x8] sm:$0xff]
    %v17 = vld [vmem:[%s0 + $0x10] sm:$0xff]
    %v18 = vld [vmem:[%s0 + $0x18] sm:$0xff]
    %v19 = vld [vmem:[%s1] sm:$0xff]
    %v20 = vld [vmem:[%s1 + $0x8] sm:$0xff]
    %v21 = vld [vmem:[%s1 + $0x10] sm:$0xff]
    %v22 = vld [vmem:[%s1 + $0x18] sm:$0xff]
    %v23 = vld [vmem:[%s1 + $0x20] sm:$0xff]
    %v24 = vld [vmem:[%s1 + $0x28] sm:$0xff]
    %v25 = vld [vmem:[%s1 + $0x30] sm:$0xff]
    %v26 = vld [vmem:[%s1 + $0x38] sm:$0xff]
    %v27 = vld [vmem:[%s2] sm:$0x1]
    %v29 = vlaneseq
    %v30 = vshrl.u32 %v29, 7
    %v31 = vsub.s32 0, %v30
    %v32 = vrot.slane %v27, %v31
    %vm34 = vcmask 523264
    %v36 = vsel %vm34, %v15, 0
    %v39 = vsel %vm34, %v16, 0
    %v42 = vsel %vm34, %v17, 0
    %v45 = vsel %vm34, %v18, 0
    %47 = vmatprep.subr.mxu0 0.0
    %48 = vmatpush1.msra.mxu0 %v19
    %49 = vmatprep.subr.mxu0 0.0
    %50 = vmatpush1.msra.mxu0 %v20
    %51 = vmatprep.subr.mxu0 0.0
    %52 = vmatpush1.msra.mxu0 %v21
    %53 = vmatprep.subr.mxu0 0.0
    %54 = vmatpush1.msra.mxu0 %v22
    %55 = vmatprep.subr.mxu0 0.0
    %56 = vmatpush1.msra.mxu0 %v23
    %57 = vmatprep.subr.mxu0 0.0
    %58 = vmatpush1.msra.mxu0 %v24
    %59 = vmatprep.subr.mxu0 0.0
    %60 = vmatpush1.msra.mxu0 %v25
    %61 = vmatprep.subr.mxu0 0.0
    %62 = vmatpush1.msra.mxu0 %v26
    %63 = vmatprep.subr.mxu0 0.0
    %64 = vmatpush1.msra.mxu0 0.0
    %65 = vmatprep.subr.mxu0 0.0
    %66 = vmatpush1.msra.mxu0 0.0
    %67 = vmatprep.subr.mxu0 0.0
    %68 = vmatpush1.msra.mxu0 0.0
    %69 = vmatprep.subr.mxu0 0.0
    %70 = vmatpush1.msra.mxu0 0.0
    %71 = vmatprep.subr.mxu0 0.0
    %72 = vmatpush1.msra.mxu0 0.0
    %73 = vmatprep.subr.mxu0 0.0
    %74 = vmatpush1.msra.mxu0 0.0
    %75 = vmatprep.subr.mxu0 0.0
    %76 = vmatpush1.msra.mxu0 0.0
    %77 = vmatprep.subr.mxu0 0.0
    %78 = vmatpush1.msra.mxu0 0.0
    %79 = vmatprep.subr.mxu0 0.0
    %80 = vmatpush1.msra.mxu0 0.0
    %81 = vmatprep.subr.mxu0 0.0
    %82 = vmatpush1.msra.mxu0 0.0
    %83 = vmatprep.subr.mxu0 0.0
    %84 = vmatpush1.msra.mxu0 0.0
    %85 = vmatprep.subr.mxu0 0.0
    %86 = vmatpush1.msra.mxu0 0.0
    %87 = vmatprep.subr.mxu0 0.0
    %88 = vmatpush1.msra.mxu0 0.0
    %89 = vmatprep.subr.mxu0 0.0
    %90 = vmatpush1.msra.mxu0 0.0
    %91 = vmatprep.subr.mxu0 0.0
    %92 = vmatpush1.msra.mxu0 0.0
    %93 = vmatprep.subr.mxu0 0.0
    %94 = vmatpush1.msra.mxu0 0.0
    %95 = vmatprep.subr.mxu0 0.0
    %96 = vmatpush1.msra.mxu0 0.0
    %97 = vmatprep.subr.mxu0 0.0
    %98 = vmatpush1.msra.mxu0 0.0
    %99 = vmatprep.subr.mxu0 0.0
    %100 = vmatpush1.msra.mxu0 0.0
    %101 = vmatprep.subr.mxu0 0.0
    %102 = vmatpush1.msra.mxu0 0.0
    %103 = vmatprep.subr.mxu0 0.0
    %104 = vmatpush1.msra.mxu0 0.0
    %105 = vmatprep.subr.mxu0 0.0
    %106 = vmatpush1.msra.mxu0 0.0
    %107 = vmatprep.subr.mxu0 0.0
    %108 = vmatpush1.msra.mxu0 0.0
    %109 = vmatprep.subr.mxu0 0.0
    %110 = vmatpush1.msra.mxu0 0.0
    %111 = vmatprep.mubr.f32.mxu0 0.0
    %112 = vmatmul.mubr.f32.gmra.mrb[0].mxu0 %v36
    %v113 = vpop.f32.mrb[0].mxu0
    %v114 = vadd.f32 %v32, %v113
    %v115 = vpop.f32.mrb[0].mxu0
    %116 = vmatprep.mubr.f32.mxu0 0.0
    %117 = vmatmul.mubr.f32.gmra.mrb[0].mxu0 %v39
    %v118 = vpop.f32.mrb[0].mxu0
    %v119 = vadd.f32 %v32, %v118
    %v120 = vpop.f32.mrb[0].mxu0
    %121 = vmatprep.mubr.f32.mxu0 0.0
    %122 = vmatmul.mubr.f32.gmra.mrb[0].mxu0 %v42
    %v123 = vpop.f32.mrb[0].mxu0
    %v124 = vadd.f32 %v32, %v123
    %v125 = vpop.f32.mrb[0].mxu0
    %126 = vmatprep.mubr.f32.mxu0 0.0
    %127 = vmatmul.mubr.f32.gmra.mrb[0].mxu0 %v45
    %v128 = vpop.f32.mrb[0].mxu0
    %v129 = vadd.f32 %v32, %v128
    %v130 = vpop.f32.mrb[0].mxu0
    %131 = vdwg.mxu0
    %132 = vst [vmem:[#allocation2] sm:$0xff] %v114
    %133 = vst [vmem:[#allocation2 + $0x8] sm:$0xff] %v119
    %134 = vst [vmem:[#allocation2 + $0x10] sm:$0xff] %v124
    %135 = vst [vmem:[#allocation2 + $0x18] sm:$0xff] %v129
    // Predicated region
    $region14: #{patch_embed.1} parent=1 // pred_check
      _
    $region15: #{patch_embed.1} parent=1 // pred_check_branch
      %137 = sbr.rel (0) target = $region17
    $region16: #{patch_embed.1} parent=1 // pred_region
      %s139 = ssub.s32 512, 512
      %140 = vsyncadd [#allocation3], %s139
      %s141 = sshll.u32 [#allocation2], 4
      %s142 = int_to_ptr.vmem [resolvable:$true] %s141
      %147 = dma.vmem_to_hbm [thread:$0]  %s142, 512, %s3, [#allocation3], 128, 128, 8
    $region17: #{patch_embed.1} parent=1 // pred_fallthru
      _
    // Predicated region
    $region18: #{patch_embed.1} parent=1 // pred_check
      _
    $region19: #{patch_embed.1} parent=1 // pred_check_branch
      %149 = sbr.rel (0) target = $region21
    $region20: #{patch_embed.1} parent=1 // pred_region
      %150 = dma.done [#allocation3], 512
    $region21: #{patch_embed.1} parent=1 // pred_fallthru
      _
    %151 = vsyncpa [#allocation3], 1

</llo_original>
